<compile_context>
chip_gen: v5e
topology: v5e:2x2
jax: 0.10.0
libtpu: 0.0.40
codegen_flags: <defaults>
</compile_context>

<pallas_src>
import math
import jax
import jax.numpy as jnp
from jax import lax
from jax.experimental import pallas as pl
from jax.experimental.pallas import tpu as pltpu


def _round_up(a, b):
    return (a + b - 1) // b * b


def _make_kernel(nk_actual, nk_pad, tk, approx_recip):
    mask_keys = nk_pad != nk_actual          # static: padding only in last KV tile
    # Real keys inside the last KV tile.  nk_pad rounds Nk up to the next tile,
    # so the last tile always holds >= 1 real key and can never be fully masked
    # (the -1e30 fill therefore never poisons the running max / sum).
    last_tile_valid = nk_actual - (nk_pad - tk)

    def kernel(q_ref, k_ref, wv_ref, o_ref, m_sc, l_sc, acc_sc):
        ki = pl.program_id(2)
        last_ki = pl.num_programs(2) - 1

        @pl.when(ki == 0)
        def _init():
            m_sc[...] = jnp.full_like(m_sc, -jnp.inf)
            l_sc[...] = jnp.zeros_like(l_sc)
            acc_sc[...] = jnp.zeros_like(acc_sc)

        k_tile = k_ref[0]                                        # (tk, D) bf16
        # Scores: contract on the last dims directly (no XLU transpose of K).
        s = lax.dot_general(q_ref[0], k_tile,
                            dimension_numbers=(((1,), (1,)), ((), ())),
                            preferred_element_type=jnp.float32)  # (tq, tk) f32

        def update(s_tile):
            # Online softmax in f32; normalization deferred to the last step.
            m_prev = m_sc[...]
            m_new = jnp.maximum(m_prev, jnp.max(s_tile, axis=-1, keepdims=True))
            alpha = jnp.exp(m_prev - m_new)
            p = jnp.exp(s_tile - m_new)
            l_sc[...] = alpha * l_sc[...] + jnp.sum(p, axis=-1, keepdims=True)
            # K-space accumulator (V = K @ wv is applied once in _finalize).
            acc_sc[...] = alpha * acc_sc[...] + jnp.dot(
                p.astype(jnp.bfloat16), k_tile, preferred_element_type=jnp.float32)
            m_sc[...] = m_new

        if mask_keys:
            # Interior KV tiles: cheap unmasked path (no iota/cmp/select VALU work).
            @pl.when(ki < last_ki)
            def _interior():
                update(s)

            # Last KV tile: mask the zero-padded keys before the softmax update.
            @pl.when(ki == last_ki)
            def _masked_tail():
                col = lax.broadcasted_iota(jnp.int32, s.shape, 1)
                update(jnp.where(col < last_tile_valid, s, -1e30))
        else:
            update(s)

        @pl.when(ki == last_ki)
        def _finalize():
            inv_l = pl.reciprocal(l_sc[...], approx=approx_recip)
            w_k = (acc_sc[...] * inv_l).astype(jnp.bfloat16)      # (tq, D)
            # Apply wv once per (batch, q-tile):  out = (w @ K) @ wv == w @ (K @ wv).
            o_ref[0] = jnp.dot(w_k, wv_ref[...],
                               preferred_element_type=jnp.float32).astype(o_ref.dtype)

    return kernel


def cross_attention(x, y, wq, wk, wv, *, block_q=256, block_k=512):
    """x: (B, Nq, in_q_dim), y: (B, Nk, in_dim).
    wq: (in_q_dim, hid_q_dim), wk: (in_dim, out_dim), wv: (in_dim, out_dim)
    (pre-transposed relative to torch.nn.Linear's (out, in) layout)."""
    B, Nq, Dq = x.shape
    _, Nk, Din = y.shape
    D = wk.shape[1]                                   # out_dim
    assert wq.shape == (Dq, D), "module requires hid_q_dim == out_dim"
    assert wv.shape == (Din, D) and Din == D, "module requires in_dim == out_dim"

    out_dtype = x.dtype
    f32, bf = jnp.float32, jnp.bfloat16
    scale = 1.0 / math.sqrt(D)                        # module divides by out_dim**0.5

    # ---- hoisted projections: single XLA GEMMs, megacore-safe ----------------
    q = x.astype(f32) @ (wq.astype(f32) * scale)      # (B, Nq, D), scale folded in
    k = y.astype(f32) @ wk.astype(f32)                # (B, Nk, D)

    # ---- lane/sublane-friendly padding & tiling -------------------------------
    d_p = _round_up(D, 128)
    tq = min(_round_up(block_q, 16), _round_up(Nq, 16))   # 16: bf16 sublane packing
    tk = min(_round_up(block_k, 16), _round_up(Nk, 16))
    if B == 1 and Nq >= 2:
        # v7x has 2 TensorCores: keep >= 2 parallel (b, q-tile) work units.
        tq = min(tq, _round_up(pl.cdiv(Nq, 2), 16))
    nq_p = _round_up(Nq, tq)
    nk_p = _round_up(Nk, tk)
    nq_t, nk_t = nq_p // tq, nk_p // tk

    q_p = jnp.pad(q, ((0, 0), (0, nq_p - Nq), (0, d_p - D))).astype(bf)
    k_p = jnp.pad(k, ((0, 0), (0, nk_p - Nk), (0, d_p - D))).astype(bf)
    wv_p = jnp.pad(wv, ((0, d_p - Din), (0, d_p - D))).astype(bf)

    grid = (B, nq_t, nk_t)

    # ---- cost estimate: 2 matmuls / KV step + 1 wv matmul / (b, q-tile) -------
    flops = (4 * B * nq_p * nk_p * d_p            # scores + p @ K
             + 2 * B * nq_p * d_p * d_p)          # (acc * inv_l) @ wv at finalize
    bytes_accessed = (q_p.size * 2                          # Q streamed once
                      + nq_t * k_p.size * 2                 # K re-streamed per q-tile
                      + wv_p.size * 2
                      + B * nq_p * d_p * jnp.dtype(out_dtype).itemsize)
    cost = pl.CostEstimate(flops=int(flops),
                           transcendentals=int(B * nq_p * nk_p),
                           bytes_accessed=int(bytes_accessed))

    # Approximate EUP reciprocal only when the output can't resolve the error.
    approx_recip = jnp.dtype(out_dtype).itemsize <= 2

    out_p = pl.pallas_call(
        _make_kernel(Nk, nk_p, tk, approx_recip),
        out_shape=jax.ShapeDtypeStruct((B, nq_p, d_p), out_dtype),
        grid_spec=pltpu.PrefetchScalarGridSpec(
            num_scalar_prefetch=0,
            grid=grid,
            in_specs=[
                # Q tile: block index independent of ki -> resident across KV steps.
                pl.BlockSpec((1, tq, d_p), lambda b, qi, ki: (b, qi, 0)),
                # K tile (streamed over ki).  If profiling on v5e still shows
                # exposed DMA here, add pipeline_mode=pl.Buffered(3).
                pl.BlockSpec((1, tk, d_p), lambda b, qi, ki: (b, ki, 0)),
                # wv: constant block index -> fetched once, stays resident.
                pl.BlockSpec((d_p, d_p), lambda b, qi, ki: (0, 0)),
            ],
            out_specs=pl.BlockSpec((1, tq, d_p), lambda b, qi, ki: (b, qi, 0)),
            scratch_shapes=[
                pltpu.VMEM((tq, 1), jnp.float32),      # running max m
                pltpu.VMEM((tq, 1), jnp.float32),      # running sum l
                pltpu.VMEM((tq, d_p), jnp.float32),    # K-space output accumulator
            ],
        ),
        compiler_params=pltpu.CompilerParams(
            dimension_semantics=("parallel", "parallel", "arbitrary"),
            # Comfortable even at tq=512 / tk=1024 on v7x's 64 MiB VMEM.
            vmem_limit_bytes=48 * 1024 * 1024,
        ),
        cost_estimate=cost,
    )(q_p, k_p, wv_p)

    return out_p[:, :Nq, :D]


def reference_cross_attention(x, y, wq, wk, wv):
    """Pure-JAX reference mirroring the PyTorch forward (f32)."""
    xq = x @ wq
    yk = y @ wk
    D = wk.shape[1]
    scores = jnp.einsum("bqd,bkd->bqk", xq, yk) / (D ** 0.5)
    w = jax.nn.softmax(scores, axis=-1)
    v = yk @ wv                                   # value applied to key(y), per module
    return jnp.einsum("bqk,bkd->bqd", w, v)


if __name__ == "__main__":
    # Small shapes honoring the module's implicit constraint
    # in_dim == out_dim == hid_q_dim (in_q_dim may differ).
    B = 2
    Nq, Nk = 24, 20                       # deliberately not tile-aligned
    in_q_dim, in_dim, out_dim, hid_q_dim = 16, 32, 32, 32

    key = jax.random.PRNGKey(0)
    kx, ky, kq, kk, kv = jax.random.split(key, 5)

    x = jax.random.normal(kx, (B, Nq, in_q_dim), dtype=jnp.float32)
    y = jax.random.normal(ky, (B, Nk, in_dim), dtype=jnp.float32)

    # nn.Linear-like init, stored pre-transposed as (in_features, out_features).
    def linear_w(k, fan_in, fan_out):
        bound = 1.0 / math.sqrt(fan_in)
        return jax.random.uniform(k, (fan_in, fan_out), jnp.float32, -bound, bound)

    wq = linear_w(kq, in_q_dim, hid_q_dim)   # query
    wk = linear_w(kk, in_dim, out_dim)       # key
    wv = linear_w(kv, in_dim, out_dim)       # value (applied to key(y) per module)

    ref = reference_cross_attention(x, y, wq, wk, wv)

    # Small blocks: exercises multiple q/k tiles + the masked last-KV-tile path.
    out_small = jax.block_until_ready(
        cross_attention(x, y, wq, wk, wv, block_q=16, block_k=16))
    # Default blocks: exercises the single-tile (whole-sequence) path.
    out_default = jax.block_until_ready(cross_attention(x, y, wq, wk, wv))

    for out in (out_small, out_default):
        assert out.shape == (B, Nq, out_dim)
        max_err = float(jnp.max(jnp.abs(out - ref)))
        assert jnp.allclose(out, ref, atol=3e-2, rtol=3e-2), (
            f"mismatch vs reference (max abs err {max_err})")

    print("KERNEL_OK")
</pallas_src>

<mosaic_0001>
module attributes {stable_mosaic.version = 11 : i64} {
  func.func @kernel(%arg0: i32, %arg1: i32, %arg2: i32, %arg3: memref<1x16x128xbf16, #tpu.memory_space<vmem>>, %arg4: memref<1x16x128xbf16, #tpu.memory_space<vmem>>, %arg5: memref<128x128xbf16, #tpu.memory_space<vmem>>, %arg6: memref<1x16x128xf32, #tpu.memory_space<vmem>>, %arg7: memref<16x1xf32, #tpu.memory_space<vmem>>, %arg8: memref<16x1xf32, #tpu.memory_space<vmem>>, %arg9: memref<16x128xf32, #tpu.memory_space<vmem>>) attributes {dimension_semantics = [#tpu.dimension_semantics<parallel>, #tpu.dimension_semantics<parallel>, #tpu.dimension_semantics<arbitrary>], iteration_bounds = array<i64: 2, 2, 2>, scalar_prefetch = 0 : i64, scratch_operands = 3 : i64, tpu.core_type = #tpu.core_type<tc>, window_params = [{transform_indices = @transform_0, window_bounds = array<i64: 1, 16, 128>}, {transform_indices = @transform_1, window_bounds = array<i64: 1, 16, 128>}, {pipeline_mode = #tpu.pipeline_mode<synchronous>, transform_indices = @transform_2, window_bounds = array<i64: 128, 128>}, {transform_indices = @transform_3, window_bounds = array<i64: 1, 16, 128>}]} {
    %c0_i32 = arith.constant 0 : i32
    %0 = arith.cmpi eq, %arg2, %c0_i32 : i32
    %1 = arith.extui %0 : i1 to i32
    %c0_i32_0 = arith.constant 0 : i32
    %2 = arith.cmpi ne, %1, %c0_i32_0 : i32
    scf.if %2 {
      %cst_11 = arith.constant 0xFF800000 : f32
      %17 = vector.broadcast %cst_11 : f32 to vector<16x1xf32>
      %c0_12 = arith.constant 0 : index
      %c0_13 = arith.constant 0 : index
      %18 = vector.load %arg7[%c0_12, %c0_13] : memref<16x1xf32, #tpu.memory_space<vmem>>, vector<16x1xf32>
      tpu.vector_store %arg7[%c0_12, %c0_13], %17 {strides = array<i32>} : memref<16x1xf32, #tpu.memory_space<vmem>>, vector<16x1xf32>,
      %cst_14 = arith.constant 0.000000e+00 : f32
      %19 = vector.broadcast %cst_14 : f32 to vector<16x1xf32>
      %c0_15 = arith.constant 0 : index
      %c0_16 = arith.constant 0 : index
      %20 = vector.load %arg8[%c0_15, %c0_16] : memref<16x1xf32, #tpu.memory_space<vmem>>, vector<16x1xf32>
      tpu.vector_store %arg8[%c0_15, %c0_16], %19 {strides = array<i32>} : memref<16x1xf32, #tpu.memory_space<vmem>>, vector<16x1xf32>,
      %cst_17 = arith.constant 0.000000e+00 : f32
      %21 = vector.broadcast %cst_17 : f32 to vector<16x128xf32>
      %c0_18 = arith.constant 0 : index
      %c0_19 = arith.constant 0 : index
      %22 = vector.load %arg9[%c0_18, %c0_19] : memref<16x128xf32, #tpu.memory_space<vmem>>, vector<16x128xf32>
      tpu.vector_store %arg9[%c0_18, %c0_19], %21 {strides = array<i32>} : memref<16x128xf32, #tpu.memory_space<vmem>>, vector<16x128xf32>,
    } else {
    }
    %c0 = arith.constant 0 : index
    %c0_1 = arith.constant 0 : index
    %c0_2 = arith.constant 0 : index
    %3 = vector.load %arg4[%c0, %c0_1, %c0_2] : memref<1x16x128xbf16, #tpu.memory_space<vmem>>, vector<1x16x128xbf16>
    %4 = vector.shape_cast %3 : vector<1x16x128xbf16> to vector<16x128xbf16>
    %c0_3 = arith.constant 0 : index
    %c0_4 = arith.constant 0 : index
    %c0_5 = arith.constant 0 : index
    %5 = vector.load %arg3[%c0_3, %c0_4, %c0_5] : memref<1x16x128xbf16, #tpu.memory_space<vmem>>, vector<1x16x128xbf16>
    %6 = vector.shape_cast %5 : vector<1x16x128xbf16> to vector<16x128xbf16>
    %cst = arith.constant dense<0.000000e+00> : vector<16x16xf32>
    %7 = tpu.matmul %6, %4, %cst {dimension_numbers = #tpu.dot_dimension_numbers<[1], [1], [0], [0], [0, 0, 1, 0], [], []>} : vector<16x128xbf16>, vector<16x128xbf16>, vector<16x16xf32> -> vector<16x16xf32>
    %c1_i32 = arith.constant 1 : i32
    %8 = arith.cmpi slt, %arg2, %c1_i32 : i32
    %9 = arith.extui %8 : i1 to i32
    %c0_i32_6 = arith.constant 0 : i32
    %10 = arith.cmpi ne, %9, %c0_i32_6 : i32
    scf.if %10 {
      %c0_11 = arith.constant 0 : index
      %c0_12 = arith.constant 0 : index
      %17 = vector.load %arg7[%c0_11, %c0_12] : memref<16x1xf32, #tpu.memory_space<vmem>>, vector<16x1xf32>
      %cst_13 = arith.constant dense<0xFF800000> : vector<16xf32>
      %18 = vector.multi_reduction <maximumf>, %7, %cst_13 [1] : vector<16x16xf32> to vector<16xf32>
      %19 = vector.shape_cast %18 : vector<16xf32> to vector<16x1xf32>
      %20 = arith.maximumf %17, %19 : vector<16x1xf32>
      %21 = arith.subf %17, %20 : vector<16x1xf32>
      %22 = math.exp %21 : vector<16x1xf32>
      %23 = vector.broadcast %20 : vector<16x1xf32> to vector<16x16xf32>
      %24 = arith.subf %7, %23 : vector<16x16xf32>
      %25 = math.exp %24 : vector<16x16xf32>
      %c0_14 = arith.constant 0 : index
      %c0_15 = arith.constant 0 : index
      %26 = vector.load %arg8[%c0_14, %c0_15] : memref<16x1xf32, #tpu.memory_space<vmem>>, vector<16x1xf32>
      %27 = arith.mulf %22, %26 : vector<16x1xf32>
      %cst_16 = arith.constant dense<0.000000e+00> : vector<16xf32>
      %28 = vector.multi_reduction <add>, %25, %cst_16 [1] : vector<16x16xf32> to vector<16xf32>
      %29 = vector.shape_cast %28 : vector<16xf32> to vector<16x1xf32>
      %30 = arith.addf %27, %29 : vector<16x1xf32>
      %c0_17 = arith.constant 0 : index
      %c0_18 = arith.constant 0 : index
      %31 = vector.load %arg8[%c0_17, %c0_18] : memref<16x1xf32, #tpu.memory_space<vmem>>, vector<16x1xf32>
      tpu.vector_store %arg8[%c0_17, %c0_18], %30 {strides = array<i32>} : memref<16x1xf32, #tpu.memory_space<vmem>>, vector<16x1xf32>,
      %c0_19 = arith.constant 0 : index
      %c0_20 = arith.constant 0 : index
      %32 = vector.load %arg9[%c0_19, %c0_20] : memref<16x128xf32, #tpu.memory_space<vmem>>, vector<16x128xf32>
      %33 = vector.broadcast %22 : vector<16x1xf32> to vector<16x128xf32>
      %34 = arith.mulf %33, %32 : vector<16x128xf32>
      %35 = arith.truncf %25 : vector<16x16xf32> to vector<16x16xbf16>
      %cst_21 = arith.constant dense<0.000000e+00> : vector<16x128xf32>
      %36 = tpu.matmul %35, %4, %cst_21 {dimension_numbers = #tpu.dot_dimension_numbers<[1], [0], [0], [1], [0, 0, 1, 1], [], []>} : vector<16x16xbf16>, vector<16x128xbf16>, vector<16x128xf32> -> vector<16x128xf32>
      %37 = arith.addf %34, %36 : vector<16x128xf32>
      %c0_22 = arith.constant 0 : index
      %c0_23 = arith.constant 0 : index
      %38 = vector.load %arg9[%c0_22, %c0_23] : memref<16x128xf32, #tpu.memory_space<vmem>>, vector<16x128xf32>
      tpu.vector_store %arg9[%c0_22, %c0_23], %37 {strides = array<i32>} : memref<16x128xf32, #tpu.memory_space<vmem>>, vector<16x128xf32>,
      %c0_24 = arith.constant 0 : index
      %c0_25 = arith.constant 0 : index
      %39 = vector.load %arg7[%c0_24, %c0_25] : memref<16x1xf32, #tpu.memory_space<vmem>>, vector<16x1xf32>
      tpu.vector_store %arg7[%c0_24, %c0_25], %20 {strides = array<i32>} : memref<16x1xf32, #tpu.memory_space<vmem>>, vector<16x1xf32>,
    } else {
    }
    %c1_i32_7 = arith.constant 1 : i32
    %11 = arith.cmpi eq, %arg2, %c1_i32_7 : i32
    %12 = arith.extui %11 : i1 to i32
    %c0_i32_8 = arith.constant 0 : i32
    %13 = arith.cmpi ne, %12, %c0_i32_8 : i32
    scf.if %13 {
      %17 = tpu.iota {dimensions = array<i32: 1>} : vector<16x16xi32>
      %c4_i32 = arith.constant 4 : i32
      %18 = vector.broadcast %c4_i32 : i32 to vector<16x16xi32>
      %19 = arith.cmpi slt, %17, %18 : vector<16x16xi32>
      %cst_11 = arith.constant -1.000000e+30 : f32
      %20 = vector.broadcast %cst_11 : f32 to vector<16x16xf32>
      %21 = arith.select %19, %7, %20 : vector<16x16xi1>, vector<16x16xf32>
      %c0_12 = arith.constant 0 : index
      %c0_13 = arith.constant 0 : index
      %22 = vector.load %arg7[%c0_12, %c0_13] : memref<16x1xf32, #tpu.memory_space<vmem>>, vector<16x1xf32>
      %cst_14 = arith.constant dense<0xFF800000> : vector<16xf32>
      %23 = vector.multi_reduction <maximumf>, %21, %cst_14 [1] : vector<16x16xf32> to vector<16xf32>
      %24 = vector.shape_cast %23 : vector<16xf32> to vector<16x1xf32>
      %25 = arith.maximumf %22, %24 : vector<16x1xf32>
      %26 = arith.subf %22, %25 : vector<16x1xf32>
      %27 = math.exp %26 : vector<16x1xf32>
      %28 = vector.broadcast %25 : vector<16x1xf32> to vector<16x16xf32>
      %29 = arith.subf %21, %28 : vector<16x16xf32>
      %30 = math.exp %29 : vector<16x16xf32>
      %c0_15 = arith.constant 0 : index
      %c0_16 = arith.constant 0 : index
      %31 = vector.load %arg8[%c0_15, %c0_16] : memref<16x1xf32, #tpu.memory_space<vmem>>, vector<16x1xf32>
      %32 = arith.mulf %27, %31 : vector<16x1xf32>
      %cst_17 = arith.constant dense<0.000000e+00> : vector<16xf32>
      %33 = vector.multi_reduction <add>, %30, %cst_17 [1] : vector<16x16xf32> to vector<16xf32>
      %34 = vector.shape_cast %33 : vector<16xf32> to vector<16x1xf32>
      %35 = arith.addf %32, %34 : vector<16x1xf32>
      %c0_18 = arith.constant 0 : index
      %c0_19 = arith.constant 0 : index
      %36 = vector.load %arg8[%c0_18, %c0_19] : memref<16x1xf32, #tpu.memory_space<vmem>>, vector<16x1xf32>
      tpu.vector_store %arg8[%c0_18, %c0_19], %35 {strides = array<i32>} : memref<16x1xf32, #tpu.memory_space<vmem>>, vector<16x1xf32>,
      %c0_20 = arith.constant 0 : index
      %c0_21 = arith.constant 0 : index
      %37 = vector.load %arg9[%c0_20, %c0_21] : memref<16x128xf32, #tpu.memory_space<vmem>>, vector<16x128xf32>
      %38 = vector.broadcast %27 : vector<16x1xf32> to vector<16x128xf32>
      %39 = arith.mulf %38, %37 : vector<16x128xf32>
      %40 = arith.truncf %30 : vector<16x16xf32> to vector<16x16xbf16>
      %cst_22 = arith.constant dense<0.000000e+00> : vector<16x128xf32>
      %41 = tpu.matmul %40, %4, %cst_22 {dimension_numbers = #tpu.dot_dimension_numbers<[1], [0], [0], [1], [0, 0, 1, 1], [], []>} : vector<16x16xbf16>, vector<16x128xbf16>, vector<16x128xf32> -> vector<16x128xf32>
      %42 = arith.addf %39, %41 : vector<16x128xf32>
      %c0_23 = arith.constant 0 : index
      %c0_24 = arith.constant 0 : index
      %43 = vector.load %arg9[%c0_23, %c0_24] : memref<16x128xf32, #tpu.memory_space<vmem>>, vector<16x128xf32>
      tpu.vector_store %arg9[%c0_23, %c0_24], %42 {strides = array<i32>} : memref<16x128xf32, #tpu.memory_space<vmem>>, vector<16x128xf32>,
      %c0_25 = arith.constant 0 : index
      %c0_26 = arith.constant 0 : index
      %44 = vector.load %arg7[%c0_25, %c0_26] : memref<16x1xf32, #tpu.memory_space<vmem>>, vector<16x1xf32>
      tpu.vector_store %arg7[%c0_25, %c0_26], %25 {strides = array<i32>} : memref<16x1xf32, #tpu.memory_space<vmem>>, vector<16x1xf32>,
    } else {
    }
    %c1_i32_9 = arith.constant 1 : i32
    %14 = arith.cmpi eq, %arg2, %c1_i32_9 : i32
    %15 = arith.extui %14 : i1 to i32
    %c0_i32_10 = arith.constant 0 : i32
    %16 = arith.cmpi ne, %15, %c0_i32_10 : i32
    scf.if %16 {
      %c0_11 = arith.constant 0 : index
      %c0_12 = arith.constant 0 : index
      %17 = vector.load %arg8[%c0_11, %c0_12] : memref<16x1xf32, #tpu.memory_space<vmem>>, vector<16x1xf32>
      %18 = tpu.reciprocal %17 : vector<16x1xf32> -> vector<16x1xf32>
      %c0_13 = arith.constant 0 : index
      %c0_14 = arith.constant 0 : index
      %19 = vector.load %arg9[%c0_13, %c0_14] : memref<16x128xf32, #tpu.memory_space<vmem>>, vector<16x128xf32>
      %20 = vector.broadcast %18 : vector<16x1xf32> to vector<16x128xf32>
      %21 = arith.mulf %19, %20 : vector<16x128xf32>
      %22 = arith.truncf %21 : vector<16x128xf32> to vector<16x128xbf16>
      %c0_15 = arith.constant 0 : index
      %c0_16 = arith.constant 0 : index
      %23 = vector.load %arg5[%c0_15, %c0_16] : memref<128x128xbf16, #tpu.memory_space<vmem>>, vector<128x128xbf16>
      %cst_17 = arith.constant dense<0.000000e+00> : vector<16x128xf32>
      %24 = tpu.matmul %22, %23, %cst_17 {dimension_numbers = #tpu.dot_dimension_numbers<[1], [0], [0], [1], [0, 0, 1, 1], [], []>} : vector<16x128xbf16>, vector<128x128xbf16>, vector<16x128xf32> -> vector<16x128xf32>
      %c0_18 = arith.constant 0 : index
      %c0_19 = arith.constant 0 : index
      %c0_20 = arith.constant 0 : index
      %25 = vector.load %arg6[%c0_18, %c0_19, %c0_20] : memref<1x16x128xf32, #tpu.memory_space<vmem>>, vector<1x16x128xf32>
      %26 = vector.shape_cast %25 : vector<1x16x128xf32> to vector<16x128xf32>
      %27 = vector.shape_cast %24 : vector<16x128xf32> to vector<1x16x128xf32>
      tpu.vector_store %arg6[%c0_18, %c0_19, %c0_20], %27 {strides = array<i32>} : memref<1x16x128xf32, #tpu.memory_space<vmem>>, vector<1x16x128xf32>,
    } else {
    }
    return
  }
  func.func @transform_0(%arg0: i32, %arg1: i32, %arg2: i32) -> (i32, i32, i32) {
    %c0_i32 = arith.constant 0 : i32
    %c0_i32_0 = arith.constant 0 : i32
    return %arg0, %arg1, %c0_i32 : i32, i32, i32
  }
  func.func @transform_1(%arg0: i32, %arg1: i32, %arg2: i32) -> (i32, i32, i32) {
    %c0_i32 = arith.constant 0 : i32
    %c0_i32_0 = arith.constant 0 : i32
    return %arg0, %arg2, %c0_i32 : i32, i32, i32
  }
  func.func @transform_2(%arg0: i32, %arg1: i32, %arg2: i32) -> (i32, i32) {
    %c0_i32 = arith.constant 0 : i32
    %c0_i32_0 = arith.constant 0 : i32
    %c0_i32_1 = arith.constant 0 : i32
    return %c0_i32, %c0_i32_0 : i32, i32
  }
  func.func @transform_3(%arg0: i32, %arg1: i32, %arg2: i32) -> (i32, i32, i32) {
    %c0_i32 = arith.constant 0 : i32
    %c0_i32_0 = arith.constant 0 : i32
    return %arg0, %arg1, %c0_i32 : i32, i32, i32
  }
}

</mosaic_0001>

<llo_original>
// kernel: tpu_custom_call.1
$region0: #{tpu_custom_call.1}
  #allocation0 [shape = 'u32[]', space=smem, size = 0x4, offset = 0x4, fixed_abs, tag = 'smem constant byte address 0x4 - core index']
  #allocation1 [shape = 'u32[72,128]{1,0:T(1,128)}', space=vmem, size = 0x9000, scoped, tag = 'internal scratch']
  #allocation2 [shape = 'f32[16,1]{1,0:T(8,128)}', space=vmem, size = 0x2000, scoped, tag = 'scratch operand']
  #allocation3 [shape = 'f32[16,1]{1,0:T(8,128)}', space=vmem, size = 0x2000, scoped, tag = 'scratch operand']
  #allocation4 [shape = 'f32[16,128]{1,0:T(8,128)}', space=vmem, size = 0x2000, scoped, tag = 'scratch operand']
  %s0 = inlined_call_operand.hbm [shape: bf16[2,32,128], index: 0, kind: input, shape index: {}]
  %s1 = inlined_call_operand.hbm [shape: bf16[2,32,128], index: 1, kind: input, shape index: {}]
  %s2 = inlined_call_operand.hbm [shape: bf16[128,128], index: 2, kind: input, shape index: {}]
  %s3 = inlined_call_operand.hbm [shape: f32[2,32,128], index: 3, kind: output, shape index: {}]
  %s4 = sld [smem:[#allocation0]]
  $region69: #{tpu_custom_call.1} parent=0
    _
  %s6 = ssub.s32 1, %s4
  %s7 = scalar_select 0, %s6, %s4
  $region1: #{tpu_custom_call.1} parent=0
    #allocation5 [shape = 'u8[8192]{0}', space=vmem, size = 0x2000, scoped, tag = 'input window, operand 0']
    #allocation6 [shape = 's32[2]{0}', space=sflag, size = 0x8, scoped, tag = 'scoped memory for tpu_custom_call.1']
    #allocation7 [shape = 's32[2]{0}', space=sflag, size = 0x8, scoped, tag = 'scoped memory for tpu_custom_call.1']
    #allocation8 [shape = 'u8[8192]{0}', space=vmem, size = 0x2000, scoped, tag = 'input window, operand 1']
    #allocation9 [shape = 's32[2]{0}', space=sflag, size = 0x8, scoped, tag = 'scoped memory for tpu_custom_call.1']
    #allocation10 [shape = 'u8[32768]{0}', space=vmem, size = 0x8000, scoped, tag = 'input window, operand 2, single buffered']
    #allocation11 [shape = 'u8[16384]{0}', space=vmem, size = 0x4000, scoped, tag = 'output window, operand 0']
    %8 = vsyncpa [#allocation6], 0
    %s9 = scalar_lea.sflag [#allocation6], 1
    %10 = vsyncpa %s9, 0
    %11 = vsyncpa [#allocation9], 0
    %s12 = scalar_lea.sflag [#allocation9], 1
    %13 = vsyncpa %s12, 0
    %14 = vsyncpa [#allocation7], 0
    %s15 = scalar_lea.sflag [#allocation7], 1
    %16 = vsyncpa %s15, 0
    loop: start=0, step=1, limit=10
    $region2: #{tpu_custom_call.1} parent=1 // loop_pre_header
      _
    $region3: #{tpu_custom_call.1} parent=1 // loop_header
      %s18 = sphi 0, %s22
      %p19 = scmp.ge.s32.totalorder %s18, 10
      %s25 = sphi 0, %s44
      %s26 = sphi 0, %s40
      %s27 = sphi 0, %s36
      %s28 = sphi 0, %s25
      %s29 = sphi 0, %s26
      %s30 = sphi 0, %s27
      %s31 = sphi 0, %s28
      %s32 = sphi 0, %s29
      %s33 = sphi 0, %s30
      %s49 = sphi 0, %s51
      %s52 = sphi 0, %s49
      %s53 = sphi 0, %s52
      %s69 = sphi 0, %s53
      %s77 = sphi 0, %s79
      %s80 = sphi 0, %s77
      %s81 = sphi 0, %s80
      %s97 = sphi 0, %s81
      %s101 = sphi 0, %s101
      %s103 = sphi 0, %s101
      %s104 = sphi 0, %s103
      %s118 = sphi 0, %s104
      %s126 = sphi 0, %s128
      %s129 = sphi 0, %s126
      %s130 = sphi 0, %s129
      %s146 = sphi 0, %s130
    $region4: #{tpu_custom_call.1} parent=1 // loop_header_branch
      %21 = sbr.rel (%p19) target = $region8
    $region5: #{tpu_custom_call.1} parent=1 // loop_body
      %s23 = ssub.s32 %s18, 1
      %s24 = ssub.s32 %s18, 2
      %s34 = sadd.s32 1, %s27
      %p35 = scmp.ge.s32.totalorder %s34, 2
      %s36 = scalar_select %p35, 0, %s34
      %s37 = sadd.s32 1, %s26
      %s38 = scalar_select %p35, %s37, %s26
      %p39 = scmp.ge.s32.totalorder %s38, 2
      %s40 = scalar_select %p39, 0, %s38
      %s41 = sadd.s32 1, %s25
      %s42 = scalar_select %p39, %s41, %s25
      %p43 = scmp.ge.s32.totalorder %s42, 2
      %s44 = scalar_select %p43, 0, %s42
      %s45 = ssub.s32 %s25, %s44
      %s46 = ssub.s32 %s26, %s40
      %s47 = sor.u32 %s45, %s46
      %p48 = scmp.eq.s32.totalorder %s47, 0
      %s50 = sadd.s32 %s49, 1
      %s51 = scalar_select %p48, %s49, %s50
      %p54 = pneg %p48
      %p55 = scmp.eq.s32.totalorder %s18, 7
      %p56 = por %p54, %p55
      %p57 = scmp.ne.s32.totalorder %s49, %s52
      %p58 = scmp.eq.s32.totalorder %s18, 0
      %p59 = por %p57, %p58
      %p60 = scmp.ne.s32.totalorder %s49, %s52
      %p61 = scmp.eq.s32.totalorder %s23, 7
      %p62 = por %p60, %p61
      %p63 = scmp.ne.s32.totalorder %s52, %s53
      %p64 = scmp.eq.s32.totalorder %s23, 0
      %p65 = por %p63, %p64
      %p66 = scmp.ne.s32.totalorder %s52, %s53
      %p67 = scmp.eq.s32.totalorder %s24, 7
      %p68 = por %p66, %p67
      %p70 = scmp.ne.s32.totalorder %s53, %s69
      %p71 = scmp.eq.s32.totalorder %s24, 0
      %p72 = por %p70, %p71
      %s73 = ssub.s32 %s25, %s44
      %s74 = ssub.s32 %s27, %s36
      %s75 = sor.u32 %s73, %s74
      %p76 = scmp.eq.s32.totalorder %s75, 0
      %s78 = sadd.s32 %s77, 1
      %s79 = scalar_select %p76, %s77, %s78
      %p82 = pneg %p76
      %p83 = scmp.eq.s32.totalorder %s18, 7
      %p84 = por %p82, %p83
      %p85 = scmp.ne.s32.totalorder %s77, %s80
      %p86 = scmp.eq.s32.totalorder %s18, 0
      %p87 = por %p85, %p86
      %p88 = scmp.ne.s32.totalorder %s77, %s80
      %p89 = scmp.eq.s32.totalorder %s23, 7
      %p90 = por %p88, %p89
      %p91 = scmp.ne.s32.totalorder %s80, %s81
      %p92 = scmp.eq.s32.totalorder %s23, 0
      %p93 = por %p91, %p92
      %p94 = scmp.ne.s32.totalorder %s80, %s81
      %p95 = scmp.eq.s32.totalorder %s24, 7
      %p96 = por %p94, %p95
      %p98 = scmp.ne.s32.totalorder %s81, %s97
      %p99 = scmp.eq.s32.totalorder %s24, 0
      %p100 = por %p98, %p99
      %s102 = sadd.s32 %s101, 1
      %p105 = scmp.eq.s32.totalorder %s18, 7
      %p106 = scmp.ne.s32.totalorder %s101, %s103
      %p107 = scmp.eq.s32.totalorder %s18, 0
      %p108 = por %p106, %p107
      %p109 = scmp.ne.s32.totalorder %s101, %s103
      %p110 = scmp.eq.s32.totalorder %s23, 7
      %p111 = por %p109, %p110
      %p112 = scmp.ne.s32.totalorder %s103, %s104
      %p113 = scmp.eq.s32.totalorder %s23, 0
      %p114 = por %p112, %p113
      %p115 = scmp.ne.s32.totalorder %s103, %s104
      %p116 = scmp.eq.s32.totalorder %s24, 7
      %p117 = por %p115, %p116
      %p119 = scmp.ne.s32.totalorder %s104, %s118
      %p120 = scmp.eq.s32.totalorder %s24, 0
      %p121 = por %p119, %p120
      %s122 = ssub.s32 %s25, %s44
      %s123 = ssub.s32 %s26, %s40
      %s124 = sor.u32 %s122, %s123
      %p125 = scmp.eq.s32.totalorder %s124, 0
      %s127 = sadd.s32 %s126, 1
      %s128 = scalar_select %p125, %s126, %s127
      %p131 = pneg %p125
      %p132 = scmp.eq.s32.totalorder %s18, 7
      %p133 = por %p131, %p132
      %p134 = scmp.ne.s32.totalorder %s126, %s129
      %p135 = scmp.eq.s32.totalorder %s18, 0
      %p136 = por %p134, %p135
      %p137 = scmp.ne.s32.totalorder %s126, %s129
      %p138 = scmp.eq.s32.totalorder %s23, 7
      %p139 = por %p137, %p138
      %p140 = scmp.ne.s32.totalorder %s129, %s130
      %p141 = scmp.eq.s32.totalorder %s23, 0
      %p142 = por %p140, %p141
      %p143 = scmp.ne.s32.totalorder %s129, %s130
      %p144 = scmp.eq.s32.totalorder %s24, 7
      %p145 = por %p143, %p144
      %p147 = scmp.ne.s32.totalorder %s130, %s146
      %p148 = scmp.eq.s32.totalorder %s24, 0
      %p149 = por %p147, %p148
      %p150 = scmp.le.s32.totalorder 1, %s18
      %p151 = scmp.lt.s32.totalorder %s18, 9
      %p152 = pnand %p150, %p151
      %p153 = pneg %p152
      // Predicated region
      $region9: #{tpu_custom_call.1} parent=5 // pred_check
        _
      $region10: #{tpu_custom_call.1} parent=5 // pred_check_branch
        %155 = sbr.rel (%p152) target = $region12
      $region11: #{tpu_custom_call.1} parent=5 // pred_region
        %s156 = ssub.s32 %s18, 1
        // Predicated region
        $region13: #{tpu_custom_call.1} parent=11 // pred_check
          %p157 = pneg %p114
        $region14: #{tpu_custom_call.1} parent=11 // pred_check_branch
          %159 = sbr.rel (%p157) target = $region16
        $region15: #{tpu_custom_call.1} parent=11 // pred_region
          %161 = vsyncadd [#allocation9], 0
          %s162 = sshll.u32 %s2, 4
          %s163 = int_to_ptr.hbm [resolvable:$true] %s162
          %s164 = sshll.u32 [#allocation10], 4
          %s165 = int_to_ptr.vmem [resolvable:$true] %s164
          %170 = dma.hbm_to_vmem [thread:$0]  %s163, 1024, %s165, [#allocation9], 64, 64, 4
        $region16: #{tpu_custom_call.1} parent=11 // pred_fallthru
          _
      $region12: #{tpu_custom_call.1} parent=5 // pred_fallthru
        _
      %p171 = scmp.lt.s32.totalorder %s18, 8
      // Predicated region
      $region17: #{tpu_custom_call.1} parent=5 // pred_check
        %p172 = pneg %p171
      $region18: #{tpu_custom_call.1} parent=5 // pred_check_branch
        %174 = sbr.rel (%p172) target = $region20
      $region19: #{tpu_custom_call.1} parent=5 // pred_region
        // Predicated region
        $region21: #{tpu_custom_call.1} parent=19 // pred_check
          %p175 = pneg %p59
        $region22: #{tpu_custom_call.1} parent=19 // pred_check_branch
          %177 = sbr.rel (%p175) target = $region24
        $region23: #{tpu_custom_call.1} parent=19 // pred_region
          %s178 = sand.u32 %s49, 1
          %s179 = scalar_lea.sflag [#allocation6], %s178
          %s180 = sand.u32 %s49, 1
          %s181 = smul.addr %s180, 8
          %s182 = scalar_lea.vmem [#allocation5], %s181
          %s183 = smul.u32 2, %s26
          %185 = vsyncadd %s179, 0
          %s186 = smul.addr %s25, 4
          %s187 = sadd.s32 %s183, %s186
          %s188 = smul.addr %s187, 4
          %s189 = scalar_lea.hbm %s0, %s188
          %s190 = sshll.u32 %s189, 4
          %s191 = int_to_ptr.hbm [resolvable:$true] %s190
          %s192 = sshll.u32 %s182, 4
          %s193 = int_to_ptr.vmem [resolvable:$true] %s192
          %198 = dma.hbm_to_vmem [thread:$0]  %s191, 128, %s193, %s179, 64, 64, 4
        $region24: #{tpu_custom_call.1} parent=19 // pred_fallthru
          _
        // Predicated region
        $region25: #{tpu_custom_call.1} parent=19 // pred_check
          %p199 = pneg %p87
        $region26: #{tpu_custom_call.1} parent=19 // pred_check_branch
          %201 = sbr.rel (%p199) target = $region28
        $region27: #{tpu_custom_call.1} parent=19 // pred_region
          %s202 = sand.u32 %s18, 1
          %s203 = scalar_lea.sflag [#allocation9], %s202
          %s204 = sand.u32 %s77, 1
          %s205 = smul.addr %s204, 8
          %s206 = scalar_lea.vmem [#allocation8], %s205
          %s207 = smul.u32 2, %s27
          %209 = vsyncadd %s203, 0
          %s210 = smul.addr %s25, 4
          %s211 = sadd.s32 %s207, %s210
          %s212 = smul.addr %s211, 4
          %s213 = scalar_lea.hbm %s1, %s212
          %s214 = sshll.u32 %s213, 4
          %s215 = int_to_ptr.hbm [resolvable:$true] %s214
          %s216 = sshll.u32 %s206, 4
          %s217 = int_to_ptr.vmem [resolvable:$true] %s216
          %222 = dma.hbm_to_vmem [thread:$0]  %s215, 128, %s217, %s203, 64, 64, 4
        $region28: #{tpu_custom_call.1} parent=19 // pred_fallthru
          _
      $region20: #{tpu_custom_call.1} parent=5 // pred_fallthru
        _
      %p223 = scmp.le.s32.totalorder 1, %s18
      %p224 = scmp.lt.s32.totalorder %s18, 9
      %p225 = pnand %p223, %p224
      %p226 = pneg %p225
      // Predicated region
      $region29: #{tpu_custom_call.1} parent=5 // pred_check
        _
      $region30: #{tpu_custom_call.1} parent=5 // pred_check_branch
        %228 = sbr.rel (%p225) target = $region32
      $region31: #{tpu_custom_call.1} parent=5 // pred_region
        %s229 = ssub.s32 %s18, 1
        %s230 = sand.u32 %s52, 1
        %s231 = scalar_lea.sflag [#allocation6], %s230
        %s232 = sand.u32 %s52, 1
        %s233 = smul.addr %s232, 8
        %s234 = scalar_lea.vmem [#allocation5], %s233
        // Predicated region
        $region33: #{tpu_custom_call.1} parent=31 // pred_check
          %p235 = pneg %p65
        $region34: #{tpu_custom_call.1} parent=31 // pred_check_branch
          %237 = sbr.rel (%p235) target = $region36
        $region35: #{tpu_custom_call.1} parent=31 // pred_region
          %239 = dma.done %s231, 128
        $region36: #{tpu_custom_call.1} parent=31 // pred_fallthru
          _
        %s240 = sand.u32 %s23, 1
        %s241 = scalar_lea.sflag [#allocation9], %s240
        %s242 = sand.u32 %s80, 1
        %s243 = smul.addr %s242, 8
        %s244 = scalar_lea.vmem [#allocation8], %s243
        // Predicated region
        $region37: #{tpu_custom_call.1} parent=31 // pred_check
          %p245 = pneg %p93
        $region38: #{tpu_custom_call.1} parent=31 // pred_check_branch
          %247 = sbr.rel (%p245) target = $region40
        $region39: #{tpu_custom_call.1} parent=31 // pred_region
          %249 = dma.done %s241, 128
        $region40: #{tpu_custom_call.1} parent=31 // pred_fallthru
          _
        // Predicated region
        $region41: #{tpu_custom_call.1} parent=31 // pred_check
          %p250 = pneg %p114
        $region42: #{tpu_custom_call.1} parent=31 // pred_check_branch
          %252 = sbr.rel (%p250) target = $region44
        $region43: #{tpu_custom_call.1} parent=31 // pred_region
          %254 = dma.done [#allocation9], 1024
        $region44: #{tpu_custom_call.1} parent=31 // pred_fallthru
          _
        %s255 = sand.u32 %s52, 1
        %s256 = scalar_lea.sflag [#allocation6], %s255
        %s257 = sand.u32 %s52, 1
        %s258 = smul.addr %s257, 8
        %s259 = scalar_lea.vmem [#allocation5], %s258
        %p260 = pneg %p65
        %p261 = pneg %p62
        %s262 = sand.u32 %s23, 1
        %s263 = scalar_lea.sflag [#allocation9], %s262
        %s264 = sand.u32 %s80, 1
        %s265 = smul.addr %s264, 8
        %s266 = scalar_lea.vmem [#allocation8], %s265
        %p267 = pneg %p93
        %p268 = pneg %p90
        %p269 = pneg %p114
        %p270 = pneg %p111
        %p271 = pneg %p142
        %p272 = pneg %p139
        %s273 = sand.u32 %s129, 1
        %s274 = scalar_lea.sflag [#allocation7], %s273
        %s275 = sand.u32 %s129, 1
        %s276 = smul.addr %s275, 16
        %s277 = scalar_lea.vmem [#allocation11], %s276
        %s278 = smul.u32 2, %s29
        %s279 = smul.u32 2, %s30
        %s280 = smul.u32 2, %s29
        %p282 = scmp.eq.s32.totalorder %s30, 0
        // Predicated region
        $region45: #{tpu_custom_call.1} parent=31 // pred_check
          %p283 = pneg %p282
        $region46: #{tpu_custom_call.1} parent=31 // pred_check_branch
          %285 = sbr.rel (%p283) target = $region48
        $region47: #{tpu_custom_call.1} parent=31 // pred_region
          %vm286 = vcmask 7168
          %287 = vst.msk [vmem:[#allocation2] sm:$0xff] %vm286, -inf
          %288 = vst.msk [vmem:[#allocation2 + $0x8] sm:$0xff] %vm286, -inf
          %289 = vst.msk [vmem:[#allocation3] sm:$0xff] %vm286, 0.0
          %290 = vst.msk [vmem:[#allocation3 + $0x8] sm:$0xff] %vm286, 0.0
          %291 = vst [vmem:[#allocation4] sm:$0xff] 0.0
          %292 = vst [vmem:[#allocation4 + $0x8] sm:$0xff] 0.0
        $region48: #{tpu_custom_call.1} parent=31 // pred_fallthru
          _
        %v293 = vld [vmem:[%s244] sm:$0xf]
        %v294 = vld [vmem:[%s244 + $0x4] sm:$0xf]
        %v295 = vld [vmem:[%s234] sm:$0xf]
        %v296 = vld [vmem:[%s234 + $0x4] sm:$0xf]
        %v299 = vunpack.c.l.b16 %v295
        %v300 = vunpack.c.l.b16 %v296
        %v301 = vpack.c.b16 %v300, %v299
        %v305 = vunpack.c.l.b16 %v293
        %v306 = vunpack.c.l.b16 %v294
        %v307 = vpack.c.b16 %v306, %v305
        %309 = vmatpush.bf16.xpose.msra.mxu0 0
        %310 = vmatpush.bf16.xpose.msra.mxu0 0
        %311 = vmatpush.bf16.xpose.msra.mxu0 0
        %312 = vmatpush.bf16.xpose.msra.mxu0 0
        %313 = vmatpush.bf16.xpose.msra.mxu0 0
        %314 = vmatpush.bf16.xpose.msra.mxu0 0
        %315 = vmatpush.bf16.xpose.msra.mxu0 0
        %316 = vmatpush.bf16.xpose.msra.mxu0 %v307
        %317 = vmatmul.bf16.gmra.mxu0 %v301
        %v318 = vpop.f32.mrf.mxu0
        %v319 = vadd.f32 0.0, %v318
        %v320 = vpop.f32.mrf.mxu0
        %v321 = vadd.f32 0.0, %v320
        %322 = vdwg.mxu0
        %p323 = scmp.lt.s32.totalorder %s30, 1
        // Predicated region
        $region49: #{tpu_custom_call.1} parent=31 // pred_check
          %p324 = pneg %p323
        $region50: #{tpu_custom_call.1} parent=31 // pred_check_branch
          %326 = sbr.rel (%p324) target = $region52
        $region51: #{tpu_custom_call.1} parent=31 // pred_region
          %v327 = vld [vmem:[#allocation2] sm:$0xff]
          %v328 = vld [vmem:[#allocation2 + $0x8] sm:$0xff]
          %vm329 = vcmask 130048
          %v330 = vsel %vm329, %v319, -inf
          %331 = vmax.xlane.f32.xlu0 %v330
          %v332 = vpop.xlane.xlu0 %331
          %v333 = vsel %vm329, %v321, -inf
          %334 = vmax.xlane.f32.xlu0 %v333
          %v335 = vpop.xlane.xlu0 %334
          %v336 = vmax.f32 %v327, %v332
          %v337 = vmax.f32 %v328, %v335
          %v338 = vsub.f32 %v327, %v336
          %v339 = vsub.f32 %v328, %v337
          %v340 = vmul.f32 %v338, 1.442695
          %v341 = vpow.pop %v340
          %v342 = vmul.f32 %v339, 1.442695
          %v343 = vpow.pop %v342
          %345 = vset.pattern.permute.xlu0 0
          %346 = vperm.xlu0 %345, %v336
          %v347 = vpop.permute.xlu0 %346
          %350 = vset.pattern.permute.xlu0 0
          %351 = vperm.xlu0 %350, %v337
          %v352 = vpop.permute.xlu0 %351
          %v354 = vsub.f32 %v319, %v347
          %v355 = vsub.f32 %v321, %v352
          %v356 = vmul.f32 %v354, 1.442695
          %v357 = vpow.pop %v356
          %v358 = vmul.f32 %v355, 1.442695
          %v359 = vpow.pop %v358
          %v360 = vld [vmem:[#allocation3] sm:$0xff]
          %v361 = vld [vmem:[#allocation3 + $0x8] sm:$0xff]
          %v362 = vmul.f32 %v341, %v360
          %v363 = vmul.f32 %v343, %v361
          %v364 = vsel %vm329, %v357, 0.0
          %365 = vadd.xlane.f32.xlu0 %v364
          %v366 = vpop.xlane.xlu0 %365
          %v367 = vsel %vm329, %v359, 0.0
          %368 = vadd.xlane.f32.xlu0 %v367
          %v369 = vpop.xlane.xlu0 %368
          %v370 = vadd.f32 %v362, %v366
          %v371 = vadd.f32 %v363, %v369
          %vm372 = vcmask 7168
          %373 = vst.msk [vmem:[#allocation3] sm:$0xff] %vm372, %v370
          %374 = vst.msk [vmem:[#allocation3 + $0x8] sm:$0xff] %vm372, %v371
          %v375 = vld [vmem:[#allocation4] sm:$0xff]
          %v376 = vld [vmem:[#allocation4 + $0x8] sm:$0xff]
          %378 = vset.pattern.permute.xlu0 0
          %379 = vperm.xlu0 %378, %v341
          %v380 = vpop.permute.xlu0 %379
          %383 = vset.pattern.permute.xlu0 0
          %384 = vperm.xlu0 %383, %v343
          %v385 = vpop.permute.xlu0 %384
          %v387 = vmul.f32 %v380, %v375
          %v388 = vmul.f32 %v385, %v376
          %v389 = vpack.c.bf16 %v359, %v357
          %v391 = vsel %vm329, %v389, 0
          %393 = vmatpush.bf16.msra.mxu0 0
          %394 = vmatpush.bf16.msra.mxu0 0
          %395 = vmatpush.bf16.msra.mxu0 0
          %396 = vmatpush.bf16.msra.mxu0 0
          %397 = vmatpush.bf16.msra.mxu0 0
          %398 = vmatpush.bf16.msra.mxu0 0
          %399 = vmatpush.bf16.msra.mxu0 0
          %400 = vmatpush.bf16.msra.mxu0 %v307
          %401 = vmatmul.bf16.gmra.mxu0 %v391
          %v402 = vpop.f32.mrf.mxu0
          %v403 = vadd.f32 0.0, %v402
          %v404 = vpop.f32.mrf.mxu0
          %v405 = vadd.f32 0.0, %v404
          %406 = vdwg.mxu0
          %v407 = vadd.f32 %v387, %v403
          %v408 = vadd.f32 %v388, %v405
          %409 = vst [vmem:[#allocation4] sm:$0xff] %v407
          %410 = vst [vmem:[#allocation4 + $0x8] sm:$0xff] %v408
          %411 = vst.msk [vmem:[#allocation2] sm:$0xff] %vm372, %v336
          %412 = vst.msk [vmem:[#allocation2 + $0x8] sm:$0xff] %vm372, %v337
        $region52: #{tpu_custom_call.1} parent=31 // pred_fallthru
          _
        %p413 = scmp.eq.s32.totalorder %s30, 1
        // Predicated region
        $region53: #{tpu_custom_call.1} parent=31 // pred_check
          %p414 = pneg %p413
        $region54: #{tpu_custom_call.1} parent=31 // pred_check_branch
          %416 = sbr.rel (%p414) target = $region56
        $region55: #{tpu_custom_call.1} parent=31 // pred_region
          %v417 = vlaneseq
          %v418 = vand.u32 %v417, 127
          %vm419 = vcmp.lt.s32.totalorder %v418, 4
          %v420 = vsel %vm419, %v319, -1e+30
          %v421 = vsel %vm419, %v321, -1e+30
          %v422 = vld [vmem:[#allocation2] sm:$0xff]
          %v423 = vld [vmem:[#allocation2 + $0x8] sm:$0xff]
          %vm424 = vcmask 130048
          %v425 = vsel %vm424, %v420, -inf
          %426 = vmax.xlane.f32.xlu0 %v425
          %v427 = vpop.xlane.xlu0 %426
          %v428 = vsel %vm424, %v421, -inf
          %429 = vmax.xlane.f32.xlu0 %v428
          %v430 = vpop.xlane.xlu0 %429
          %v431 = vmax.f32 %v422, %v427
          %v432 = vmax.f32 %v423, %v430
          %v433 = vsub.f32 %v422, %v431
          %v434 = vsub.f32 %v423, %v432
          %v435 = vmul.f32 %v433, 1.442695
          %v436 = vpow.pop %v435
          %v437 = vmul.f32 %v434, 1.442695
          %v438 = vpow.pop %v437
          %440 = vset.pattern.permute.xlu0 0
          %441 = vperm.xlu0 %440, %v431
          %v442 = vpop.permute.xlu0 %441
          %445 = vset.pattern.permute.xlu0 0
          %446 = vperm.xlu0 %445, %v432
          %v447 = vpop.permute.xlu0 %446
          %v449 = vsub.f32 %v420, %v442
          %v450 = vsub.f32 %v421, %v447
          %v451 = vmul.f32 %v449, 1.442695
          %v452 = vpow.pop %v451
          %v453 = vmul.f32 %v450, 1.442695
          %v454 = vpow.pop %v453
          %v455 = vld [vmem:[#allocation3] sm:$0xff]
          %v456 = vld [vmem:[#allocation3 + $0x8] sm:$0xff]
          %v457 = vmul.f32 %v436, %v455
          %v458 = vmul.f32 %v438, %v456
          %v459 = vsel %vm424, %v452, 0.0
          %460 = vadd.xlane.f32.xlu0 %v459
          %v461 = vpop.xlane.xlu0 %460
          %v462 = vsel %vm424, %v454, 0.0
          %463 = vadd.xlane.f32.xlu0 %v462
          %v464 = vpop.xlane.xlu0 %463
          %v465 = vadd.f32 %v457, %v461
          %v466 = vadd.f32 %v458, %v464
          %vm467 = vcmask 7168
          %468 = vst.msk [vmem:[#allocation3] sm:$0xff] %vm467, %v465
          %469 = vst.msk [vmem:[#allocation3 + $0x8] sm:$0xff] %vm467, %v466
          %v470 = vld [vmem:[#allocation4] sm:$0xff]
          %v471 = vld [vmem:[#allocation4 + $0x8] sm:$0xff]
          %473 = vset.pattern.permute.xlu0 0
          %474 = vperm.xlu0 %473, %v436
          %v475 = vpop.permute.xlu0 %474
          %478 = vset.pattern.permute.xlu0 0
          %479 = vperm.xlu0 %478, %v438
          %v480 = vpop.permute.xlu0 %479
          %v482 = vmul.f32 %v475, %v470
          %v483 = vmul.f32 %v480, %v471
          %v484 = vpack.c.bf16 %v454, %v452
          %v486 = vsel %vm424, %v484, 0
          %488 = vmatpush.bf16.msra.mxu0 0
          %489 = vmatpush.bf16.msra.mxu0 0
          %490 = vmatpush.bf16.msra.mxu0 0
          %491 = vmatpush.bf16.msra.mxu0 0
          %492 = vmatpush.bf16.msra.mxu0 0
          %493 = vmatpush.bf16.msra.mxu0 0
          %494 = vmatpush.bf16.msra.mxu0 0
          %495 = vmatpush.bf16.msra.mxu0 %v307
          %496 = vmatmul.bf16.gmra.mxu0 %v486
          %v497 = vpop.f32.mrf.mxu0
          %v498 = vadd.f32 0.0, %v497
          %v499 = vpop.f32.mrf.mxu0
          %v500 = vadd.f32 0.0, %v499
          %501 = vdwg.mxu0
          %v502 = vadd.f32 %v482, %v498
          %v503 = vadd.f32 %v483, %v500
          %504 = vst [vmem:[#allocation4] sm:$0xff] %v502
          %505 = vst [vmem:[#allocation4 + $0x8] sm:$0xff] %v503
          %506 = vst.msk [vmem:[#allocation2] sm:$0xff] %vm467, %v431
          %507 = vst.msk [vmem:[#allocation2 + $0x8] sm:$0xff] %vm467, %v432
          %v508 = vld [vmem:[#allocation3] sm:$0xff]
          %v509 = vld [vmem:[#allocation3 + $0x8] sm:$0xff]
          %v510 = vrcp.pop %v508
          %v511 = vmul.f32 %v508, %v510
          %v512 = vsub.f32 1.0, %v511
          %v513 = vmul.f32 %v510, %v512
          %v514 = vadd.f32 %v510, %v513
          %vm515 = vweird.f32 %v508
          %vm516 = vweird.f32 %v510
          %vm517 = vmor %vm515, %vm516
          %v518 = vsel %vm517, %v510, %v514
          %v519 = vand.u32 2147483647, %v508
          %vm520 = vcmp.eq.f32.partialorder %v519, 8.507059e+37
          %v521 = vand.u32 %v508, 2147483648
          %v522 = vor.u32 1.1754944e-38, %v521
          %v523 = vsel %vm520, %v522, %v518
          %v524 = vrcp.pop %v509
          %v525 = vmul.f32 %v509, %v524
          %v526 = vsub.f32 1.0, %v525
          %v527 = vmul.f32 %v524, %v526
          %v528 = vadd.f32 %v524, %v527
          %vm529 = vweird.f32 %v509
          %vm530 = vweird.f32 %v524
          %vm531 = vmor %vm529, %vm530
          %v532 = vsel %vm531, %v524, %v528
          %v533 = vand.u32 2147483647, %v509
          %vm534 = vcmp.eq.f32.partialorder %v533, 8.507059e+37
          %v535 = vand.u32 %v509, 2147483648
          %v536 = vor.u32 1.1754944e-38, %v535
          %v537 = vsel %vm534, %v536, %v532
          %v538 = vld [vmem:[#allocation4] sm:$0xff]
          %v539 = vld [vmem:[#allocation4 + $0x8] sm:$0xff]
          %541 = vset.pattern.permute.xlu0 0
          %542 = vperm.xlu0 %541, %v523
          %v543 = vpop.permute.xlu0 %542
          %546 = vset.pattern.permute.xlu0 0
          %547 = vperm.xlu0 %546, %v537
          %v548 = vpop.permute.xlu0 %547
          %v550 = vmul.f32 %v538, %v543
          %v551 = vmul.f32 %v539, %v548
          %v552 = vpack.c.bf16 %v551, %v550
          %v553 = vld [vmem:[#allocation10] sm:$0xf]
          %v554 = vld [vmem:[#allocation10 + $0x4] sm:$0xf]
          %v555 = vld [vmem:[#allocation10 + $0x8] sm:$0xf]
          %v556 = vld [vmem:[#allocation10 + $0xc] sm:$0xf]
          %v557 = vld [vmem:[#allocation10 + $0x10] sm:$0xf]
          %v558 = vld [vmem:[#allocation10 + $0x14] sm:$0xf]
          %v559 = vld [vmem:[#allocation10 + $0x18] sm:$0xf]
          %v560 = vld [vmem:[#allocation10 + $0x1c] sm:$0xf]
          %v561 = vld [vmem:[#allocation10 + $0x20] sm:$0xf]
          %v562 = vld [vmem:[#allocation10 + $0x24] sm:$0xf]
          %v563 = vld [vmem:[#allocation10 + $0x28] sm:$0xf]
          %v564 = vld [vmem:[#allocation10 + $0x2c] sm:$0xf]
          %v565 = vld [vmem:[#allocation10 + $0x30] sm:$0xf]
          %v566 = vld [vmem:[#allocation10 + $0x34] sm:$0xf]
          %v567 = vld [vmem:[#allocation10 + $0x38] sm:$0xf]
          %v568 = vld [vmem:[#allocation10 + $0x3c] sm:$0xf]
          %v585 = vunpack.c.l.b16 %v553
          %v586 = vunpack.c.l.b16 %v554
          %v587 = vunpack.c.l.b16 %v555
          %v588 = vunpack.c.l.b16 %v556
          %v589 = vunpack.c.l.b16 %v557
          %v590 = vunpack.c.l.b16 %v558
          %v591 = vunpack.c.l.b16 %v559
          %v592 = vunpack.c.l.b16 %v560
          %v593 = vunpack.c.l.b16 %v561
          %v594 = vunpack.c.l.b16 %v562
          %v595 = vunpack.c.l.b16 %v563
          %v596 = vunpack.c.l.b16 %v564
          %v597 = vunpack.c.l.b16 %v565
          %v598 = vunpack.c.l.b16 %v566
          %v599 = vunpack.c.l.b16 %v567
          %v600 = vunpack.c.l.b16 %v568
          %v601 = vpack.c.b16 %v586, %v585
          %v602 = vpack.c.b16 %v588, %v587
          %v603 = vpack.c.b16 %v590, %v589
          %v604 = vpack.c.b16 %v592, %v591
          %v605 = vpack.c.b16 %v594, %v593
          %v606 = vpack.c.b16 %v596, %v595
          %v607 = vpack.c.b16 %v598, %v597
          %v608 = vpack.c.b16 %v600, %v599
          %617 = vmatpush.bf16.msra.mxu0 %v608
          %618 = vmatpush.bf16.msra.mxu0 %v607
          %619 = vmatpush.bf16.msra.mxu0 %v606
          %620 = vmatpush.bf16.msra.mxu0 %v605
          %621 = vmatpush.bf16.msra.mxu0 %v604
          %622 = vmatpush.bf16.msra.mxu0 %v603
          %623 = vmatpush.bf16.msra.mxu0 %v602
          %624 = vmatpush.bf16.msra.mxu0 %v601
          %625 = vmatmul.bf16.gmra.mxu0 %v552
          %v626 = vpop.f32.mrf.mxu0
          %v627 = vadd.f32 0.0, %v626
          %v628 = vpop.f32.mrf.mxu0
          %v629 = vadd.f32 0.0, %v628
          %630 = vdwg.mxu0
          %631 = vst [vmem:[%s277] sm:$0xff] %v627
          %632 = vst [vmem:[%s277 + $0x8] sm:$0xff] %v629
        $region56: #{tpu_custom_call.1} parent=31 // pred_fallthru
          _
        %s633 = sand.u32 %s129, 1
        %s634 = scalar_lea.sflag [#allocation7], %s633
        %s635 = sand.u32 %s129, 1
        %s636 = smul.addr %s635, 16
        %s637 = scalar_lea.vmem [#allocation11], %s636
        // Predicated region
        $region57: #{tpu_custom_call.1} parent=31 // pred_check
          %p638 = pneg %p139
        $region58: #{tpu_custom_call.1} parent=31 // pred_check_branch
          %640 = sbr.rel (%p638) target = $region60
        $region59: #{tpu_custom_call.1} parent=31 // pred_region
          %s641 = smul.u32 2, %s29
          %643 = vsyncadd %s634, 0
          %s644 = smul.addr %s28, 4
          %s645 = sadd.s32 %s641, %s644
          %s646 = smul.addr %s645, 8
          %s647 = scalar_lea.hbm %s3, %s646
          %s648 = sshll.u32 %s637, 4
          %s649 = int_to_ptr.vmem [resolvable:$true] %s648
          %s650 = sshll.u32 %s647, 4
          %s651 = int_to_ptr.hbm [resolvable:$true] %s650
          %656 = dma.vmem_to_hbm [thread:$0]  %s649, 256, %s651, %s634, 128, 128, 8
        $region60: #{tpu_custom_call.1} parent=31 // pred_fallthru
          _
      $region32: #{tpu_custom_call.1} parent=5 // pred_fallthru
        _
      %p657 = scmp.le.s32.totalorder 2, %s18
      // Predicated region
      $region61: #{tpu_custom_call.1} parent=5 // pred_check
        %p658 = pneg %p657
      $region62: #{tpu_custom_call.1} parent=5 // pred_check_branch
        %660 = sbr.rel (%p658) target = $region64
      $region63: #{tpu_custom_call.1} parent=5 // pred_region
        %s661 = ssub.s32 %s18, 2
        // Predicated region
        $region65: #{tpu_custom_call.1} parent=63 // pred_check
          %p662 = pneg %p145
        $region66: #{tpu_custom_call.1} parent=63 // pred_check_branch
          %664 = sbr.rel (%p662) target = $region68
        $region67: #{tpu_custom_call.1} parent=63 // pred_region
          %s665 = sand.u32 %s130, 1
          %s666 = scalar_lea.sflag [#allocation7], %s665
          %s667 = sand.u32 %s130, 1
          %s668 = smul.addr %s667, 16
          %s669 = scalar_lea.vmem [#allocation11], %s668
          %671 = dma.done %s666, 256
        $region68: #{tpu_custom_call.1} parent=63 // pred_fallthru
          _
      $region64: #{tpu_custom_call.1} parent=5 // pred_fallthru
        _
    $region6: #{tpu_custom_call.1} parent=1 // loop_footer
      %s22 = sadd.s32 1, %s18
    $region7: #{tpu_custom_call.1} parent=1 // loop_footer_branch
      %17 = sbr.rel target = $region3
    $region8: #{tpu_custom_call.1} parent=1 // loop_exit
      _
    %672 = vsyncpa [#allocation6], 1
    %s673 = scalar_lea.sflag [#allocation6], 1
    %674 = vsyncpa %s673, 1
    %675 = vsyncpa [#allocation9], 1
    %s676 = scalar_lea.sflag [#allocation9], 1
    %677 = vsyncpa %s676, 1
    %678 = vsyncpa [#allocation7], 1
    %s679 = scalar_lea.sflag [#allocation7], 1
    %680 = vsyncpa %s679, 1

</llo_original>
